<compile_context>
chip_gen: v6e
topology: v6e:2x2x1
jax: 0.10.0
libtpu: 0.0.40
codegen_flags: <defaults>
</compile_context>

<pallas_src>
import math

import jax
import jax.numpy as jnp
from jax.experimental import pallas as pl
from jax.experimental.pallas import tpu as pltpu


_INV_SQRT2 = 1.0 / math.sqrt(2.0)
_MIB = 1024 * 1024


def _gelu_exact_f32(x):
    # nn.GELU() default is the exact erf-based GELU; keep the math in f32.
    # TODO(synk): optionally use tanh-approx / bf16 GELU on v6e/v7x when the
    # model tolerates it (routes work to the EUP / halves VALU ops).
    return 0.5 * x * (1.0 + jax.lax.erf(x * _INV_SQRT2))


def _ffn_gelu_kernel(x_ref, w1t_ref, b1_ref, w2_ref, b2_ref, o_ref, acc_ref):
    f = pl.program_id(1)

    @pl.when(f == 0)
    def _init():
        # Fold b2 into the accumulator init (costs the same as writing zeros).
        acc_ref[...] = jnp.broadcast_to(
            b2_ref[...].astype(jnp.float32), acc_ref.shape)

    # fc1 on this hidden-dim slab: x (tm, E) . w1t (tf, E) contracted over E.
    # Native-dtype operands, f32 accumulation on the MXU.
    h = jax.lax.dot_general(
        x_ref[...], w1t_ref[...],
        dimension_numbers=(((1,), (1,)), ((), ())),
        preferred_element_type=jnp.float32)
    h = _gelu_exact_f32(h + b1_ref[...].astype(jnp.float32))

    # fc2 partial product accumulated into the resident f32 scratch.
    acc_ref[...] += jnp.dot(h.astype(w2_ref.dtype), w2_ref[...],
                            preferred_element_type=jnp.float32)

    @pl.when(f == pl.num_programs(1) - 1)
    def _finalize():
        o_ref[...] = acc_ref[...].astype(o_ref.dtype)


def _round_up(x, m):
    return ((x + m - 1) // m) * m


def _sublane(dtype):
    # Packed sublane tile height for the dtype (second-to-last dim).
    itemsize = jnp.dtype(dtype).itemsize
    if itemsize >= 4:
        return 8
    if itemsize == 2:
        return 16
    return 32


def _vmem_capacity_bytes():
    try:
        cap = int(pltpu.get_tpu_info().vmem_capacity_bytes)
        if cap > 0:
            return cap
    except Exception:
        pass
    return 64 * _MIB  # conservative fallback (v7x-sized)


def _footprint_bytes(tm, tf, E, x_itemsize, w_itemsize):
    """Rough per-step VMEM footprint with double buffering."""
    io = 2 * tm * E * x_itemsize * 2                       # x + out tiles
    weights = 2 * (2 * tf * E * w_itemsize                 # w1t + w2 slabs
                   + tf * w_itemsize + E * w_itemsize)     # b1 slab + b2
    acc = tm * E * 4                                       # f32 accumulator
    hidden = tm * tf * 4 + tm * tf * w_itemsize            # h f32 + cast copy
    return io + weights + acc + hidden


def ffn_gelu(x, w1, b1, w2, b2, *, tm=None, tf=None):
    """Fused fc1 -> GELU -> fc2.

    x: (M, E); w1: (E, F); b1: (F,); w2: (F, E); b2: (E,). Returns (M, E).
    """
    M, E = x.shape
    F = w1.shape[1]

    x_item = jnp.dtype(x.dtype).itemsize
    w_item = jnp.dtype(w1.dtype).itemsize
    sub = _sublane(x.dtype)

    # ---- generation-aware budgets -----------------------------------------
    vmem_cap = _vmem_capacity_bytes()
    big_part = vmem_cap >= 96 * _MIB            # v5e / v6e (128 MiB VMEM)
    # Hard ceiling we pass to the compiler (leave headroom for Mosaic scratch).
    vmem_ceiling = vmem_cap - max(8 * _MIB, vmem_cap // 8)   # 112 / 56 MiB
    # Target we size tiles against (extra margin for un-modelled temporaries).
    tile_budget = int(vmem_ceiling * 0.85)

    tm_des = tm if tm is not None else (1024 if big_part else 512)
    tf_des = tf if tf is not None else (1024 if big_part else 512)

    # ---- token (M) tile ----------------------------------------------------
    tm_eff = min(tm_des, _round_up(M, sub))
    tm_eff = max(sub, _round_up(tm_eff, sub))

    # ---- hidden (F) tile ---------------------------------------------------
    if F <= tf_des:
        tf_eff = F                      # full-dim block (always legal)
        tf_tiled = False
    else:
        tf_eff = tf_des                 # multiple of 128 by construction
        tf_tiled = True
        assert tf_eff % 128 == 0, "hidden tile must be a multiple of 128"

    # ---- shrink tiles until the footprint fits (tf first: free wrt HBM) ----
    while _footprint_bytes(tm_eff, tf_eff, E, x_item, w_item) > tile_budget:
        if tf_tiled and tf_eff > 256:
            tf_eff //= 2
        elif tm_eff > sub:
            new_tm = max(sub, _round_up(tm_eff // 2, sub))
            if new_tm == tm_eff:
                break
            tm_eff = new_tm
        else:
            break

    # ---- megacore: make sure the parallel M axis has >= 2 blocks -----------
    if M > sub:
        while (_round_up(M, tm_eff) // tm_eff) < 2 and tm_eff > sub:
            new_tm = max(sub, _round_up(tm_eff // 2, sub))
            if new_tm == tm_eff:
                break
            tm_eff = new_tm

    # ---- pad M and F -------------------------------------------------------
    M_pad = _round_up(M, tm_eff)
    if M_pad != M:
        x = jnp.pad(x, ((0, M_pad - M), (0, 0)))

    F_pad = _round_up(F, tf_eff)
    # Weight layout: both slabs streamed as contiguous (tf, E) row blocks.
    w1t = w1.T                                   # (F, E)
    if F_pad != F:
        # Zero-padded hidden columns: gelu(0 + 0) = 0 and padded w2 rows are 0,
        # so they contribute nothing to the accumulator.
        w1t = jnp.pad(w1t, ((0, F_pad - F), (0, 0)))
        b1 = jnp.pad(b1, (0, F_pad - F))
        w2 = jnp.pad(w2, ((0, F_pad - F), (0, 0)))

    b1_2d = b1.reshape(1, F_pad)
    b2_2d = b2.reshape(1, E)

    grid = (M_pad // tm_eff, F_pad // tf_eff)

    est = _footprint_bytes(tm_eff, tf_eff, E, x_item, w_item)
    vmem_limit = int(min(max(est * 5 // 4, 32 * _MIB), vmem_ceiling))

    out = pl.pallas_call(
        _ffn_gelu_kernel,
        out_shape=jax.ShapeDtypeStruct((M_pad, E), x.dtype),
        grid_spec=pltpu.PrefetchScalarGridSpec(
            num_scalar_prefetch=0,
            grid=grid,
            in_specs=[
                pl.BlockSpec((tm_eff, E), lambda i, f: (i, 0)),   # x tile
                pl.BlockSpec((tf_eff, E), lambda i, f: (f, 0)),   # w1t slab
                pl.BlockSpec((1, tf_eff), lambda i, f: (0, f)),   # b1 slab
                pl.BlockSpec((tf_eff, E), lambda i, f: (f, 0)),   # w2 slab
                pl.BlockSpec((1, E),      lambda i, f: (0, 0)),   # b2
            ],
            out_specs=pl.BlockSpec((tm_eff, E), lambda i, f: (i, 0)),
            scratch_shapes=[pltpu.VMEM((tm_eff, E), jnp.float32)],
        ),
        compiler_params=pltpu.CompilerParams(
            dimension_semantics=("parallel", "arbitrary"),
            vmem_limit_bytes=vmem_limit,
        ),
    )(x, w1t, b1_2d, w2, b2_2d)

    return out[:M]


def ffn_gelu_reference(x, w1, b1, w2, b2):
    h = x.astype(jnp.float32) @ w1.astype(jnp.float32) + b1.astype(jnp.float32)
    h = _gelu_exact_f32(h)
    y = h @ w2.astype(jnp.float32) + b2.astype(jnp.float32)
    return y.astype(x.dtype)


if __name__ == "__main__":
    # Small but lane-dense shapes: batch=2, seq=8 -> M=16 tokens;
    # embed_dim=128, ffn_embed_dim=256 (multiples of 128 keep stores unmasked).
    batch, seq, embed_dim, ffn_embed_dim = 2, 8, 128, 256

    key = jax.random.PRNGKey(0)
    kx, kw1, kb1, kw2, kb2 = jax.random.split(key, 5)

    x = jax.random.normal(kx, (batch, seq, embed_dim), dtype=jnp.float32)
    # Deterministic "init" of the Linear parameters (stored as (in, out)).
    w1 = jax.random.normal(kw1, (embed_dim, ffn_embed_dim), jnp.float32) * 0.05
    b1 = jax.random.normal(kb1, (ffn_embed_dim,), jnp.float32) * 0.05
    w2 = jax.random.normal(kw2, (ffn_embed_dim, embed_dim), jnp.float32) * 0.05
    b2 = jax.random.normal(kb2, (embed_dim,), jnp.float32) * 0.05

    x2d = x.reshape(batch * seq, embed_dim)
    out = ffn_gelu(x2d, w1, b1, w2, b2)
    out = jax.block_until_ready(out).reshape(batch, seq, embed_dim)

    ref = ffn_gelu_reference(x2d, w1, b1, w2, b2).reshape(batch, seq, embed_dim)
    assert out.shape == (batch, seq, embed_dim)
    assert jnp.allclose(out, ref, atol=1e-4, rtol=1e-4), "mismatch vs reference"

    print("KERNEL_OK")
</pallas_src>

<mosaic_0001>
module attributes {stable_mosaic.version = 11 : i64} {
  func.func @_ffn_gelu_kernel(%arg0: i32, %arg1: i32, %arg2: memref<8x128xf32, #tpu.memory_space<vmem>>, %arg3: memref<256x128xf32, #tpu.memory_space<vmem>>, %arg4: memref<1x256xf32, #tpu.memory_space<vmem>>, %arg5: memref<256x128xf32, #tpu.memory_space<vmem>>, %arg6: memref<1x128xf32, #tpu.memory_space<vmem>>, %arg7: memref<8x128xf32, #tpu.memory_space<vmem>>, %arg8: memref<8x128xf32, #tpu.memory_space<vmem>>) attributes {dimension_semantics = [#tpu.dimension_semantics<parallel>, #tpu.dimension_semantics<arbitrary>], iteration_bounds = array<i64: 2, 1>, scalar_prefetch = 0 : i64, scratch_operands = 1 : i64, tpu.core_type = #tpu.core_type<tc>, window_params = [{transform_indices = @transform_0, window_bounds = array<i64: 8, 128>}, {transform_indices = @transform_1, window_bounds = array<i64: 256, 128>}, {transform_indices = @transform_2, window_bounds = array<i64: 1, 256>}, {transform_indices = @transform_3, window_bounds = array<i64: 256, 128>}, {pipeline_mode = #tpu.pipeline_mode<synchronous>, transform_indices = @transform_4, window_bounds = array<i64: 1, 128>}, {transform_indices = @transform_5, window_bounds = array<i64: 8, 128>}]} {
    %c0_i32 = arith.constant 0 : i32
    %0 = arith.cmpi eq, %arg1, %c0_i32 : i32
    %1 = arith.extui %0 : i1 to i32
    %c0_i32_0 = arith.constant 0 : i32
    %2 = arith.cmpi ne, %1, %c0_i32_0 : i32
    scf.if %2 {
      %c0_18 = arith.constant 0 : index
      %c0_19 = arith.constant 0 : index
      %25 = vector.load %arg6[%c0_18, %c0_19] : memref<1x128xf32, #tpu.memory_space<vmem>>, vector<1x128xf32>
      %26 = vector.shape_cast %25 : vector<1x128xf32> to vector<1x128xf32>
      %27 = vector.broadcast %26 : vector<1x128xf32> to vector<8x128xf32>
      %c0_20 = arith.constant 0 : index
      %c0_21 = arith.constant 0 : index
      %28 = vector.load %arg8[%c0_20, %c0_21] : memref<8x128xf32, #tpu.memory_space<vmem>>, vector<8x128xf32>
      tpu.vector_store %arg8[%c0_20, %c0_21], %27 {strides = array<i32>} : memref<8x128xf32, #tpu.memory_space<vmem>>, vector<8x128xf32>,
    } else {
    }
    %c0 = arith.constant 0 : index
    %c0_1 = arith.constant 0 : index
    %3 = vector.load %arg2[%c0, %c0_1] : memref<8x128xf32, #tpu.memory_space<vmem>>, vector<8x128xf32>
    %c0_2 = arith.constant 0 : index
    %c0_3 = arith.constant 0 : index
    %4 = vector.load %arg3[%c0_2, %c0_3] : memref<256x128xf32, #tpu.memory_space<vmem>>, vector<256x128xf32>
    %cst = arith.constant dense<0.000000e+00> : vector<8x256xf32>
    %5 = tpu.matmul %3, %4, %cst {dimension_numbers = #tpu.dot_dimension_numbers<[1], [1], [0], [0], [0, 0, 1, 0], [], []>} : vector<8x128xf32>, vector<256x128xf32>, vector<8x256xf32> -> vector<8x256xf32>
    %c0_4 = arith.constant 0 : index
    %c0_5 = arith.constant 0 : index
    %6 = vector.load %arg4[%c0_4, %c0_5] : memref<1x256xf32, #tpu.memory_space<vmem>>, vector<1x256xf32>
    %7 = vector.broadcast %6 : vector<1x256xf32> to vector<8x256xf32>
    %8 = arith.addf %5, %7 : vector<8x256xf32>
    %cst_6 = arith.constant 5.000000e-01 : f32
    %9 = vector.broadcast %cst_6 : f32 to vector<8x256xf32>
    %10 = arith.mulf %9, %8 : vector<8x256xf32>
    %cst_7 = arith.constant 0.707106769 : f32
    %11 = vector.broadcast %cst_7 : f32 to vector<8x256xf32>
    %12 = arith.mulf %8, %11 : vector<8x256xf32>
    %13 = math.erf %12 : vector<8x256xf32>
    %cst_8 = arith.constant 1.000000e+00 : f32
    %14 = vector.broadcast %cst_8 : f32 to vector<8x256xf32>
    %15 = arith.addf %14, %13 : vector<8x256xf32>
    %16 = arith.mulf %10, %15 : vector<8x256xf32>
    %c0_9 = arith.constant 0 : index
    %c0_10 = arith.constant 0 : index
    %17 = vector.load %arg8[%c0_9, %c0_10] : memref<8x128xf32, #tpu.memory_space<vmem>>, vector<8x128xf32>
    %c0_11 = arith.constant 0 : index
    %c0_12 = arith.constant 0 : index
    %18 = vector.load %arg5[%c0_11, %c0_12] : memref<256x128xf32, #tpu.memory_space<vmem>>, vector<256x128xf32>
    %cst_13 = arith.constant dense<0.000000e+00> : vector<8x128xf32>
    %19 = tpu.matmul %16, %18, %cst_13 {dimension_numbers = #tpu.dot_dimension_numbers<[1], [0], [0], [1], [0, 0, 1, 1], [], []>} : vector<8x256xf32>, vector<256x128xf32>, vector<8x128xf32> -> vector<8x128xf32>
    %20 = arith.addf %17, %19 : vector<8x128xf32>
    %c0_14 = arith.constant 0 : index
    %c0_15 = arith.constant 0 : index
    %21 = vector.load %arg8[%c0_14, %c0_15] : memref<8x128xf32, #tpu.memory_space<vmem>>, vector<8x128xf32>
    tpu.vector_store %arg8[%c0_14, %c0_15], %20 {strides = array<i32>} : memref<8x128xf32, #tpu.memory_space<vmem>>, vector<8x128xf32>,
    %c0_i32_16 = arith.constant 0 : i32
    %22 = arith.cmpi eq, %arg1, %c0_i32_16 : i32
    %23 = arith.extui %22 : i1 to i32
    %c0_i32_17 = arith.constant 0 : i32
    %24 = arith.cmpi ne, %23, %c0_i32_17 : i32
    scf.if %24 {
      %c0_18 = arith.constant 0 : index
      %c0_19 = arith.constant 0 : index
      %25 = vector.load %arg8[%c0_18, %c0_19] : memref<8x128xf32, #tpu.memory_space<vmem>>, vector<8x128xf32>
      %c0_20 = arith.constant 0 : index
      %c0_21 = arith.constant 0 : index
      %26 = vector.load %arg7[%c0_20, %c0_21] : memref<8x128xf32, #tpu.memory_space<vmem>>, vector<8x128xf32>
      tpu.vector_store %arg7[%c0_20, %c0_21], %25 {strides = array<i32>} : memref<8x128xf32, #tpu.memory_space<vmem>>, vector<8x128xf32>,
    } else {
    }
    return
  }
  func.func @transform_0(%arg0: i32, %arg1: i32) -> (i32, i32) {
    %c0_i32 = arith.constant 0 : i32
    %c0_i32_0 = arith.constant 0 : i32
    return %arg0, %c0_i32 : i32, i32
  }
  func.func @transform_1(%arg0: i32, %arg1: i32) -> (i32, i32) {
    %c0_i32 = arith.constant 0 : i32
    %c0_i32_0 = arith.constant 0 : i32
    return %arg1, %c0_i32 : i32, i32
  }
  func.func @transform_2(%arg0: i32, %arg1: i32) -> (i32, i32) {
    %c0_i32 = arith.constant 0 : i32
    %c0_i32_0 = arith.constant 0 : i32
    return %c0_i32, %arg1 : i32, i32
  }
  func.func @transform_3(%arg0: i32, %arg1: i32) -> (i32, i32) {
    %c0_i32 = arith.constant 0 : i32
    %c0_i32_0 = arith.constant 0 : i32
    return %arg1, %c0_i32 : i32, i32
  }
  func.func @transform_4(%arg0: i32, %arg1: i32) -> (i32, i32) {
    %c0_i32 = arith.constant 0 : i32
    %c0_i32_0 = arith.constant 0 : i32
    %c0_i32_1 = arith.constant 0 : i32
    return %c0_i32, %c0_i32_0 : i32, i32
  }
  func.func @transform_5(%arg0: i32, %arg1: i32) -> (i32, i32) {
    %c0_i32 = arith.constant 0 : i32
    %c0_i32_0 = arith.constant 0 : i32
    return %arg0, %c0_i32 : i32, i32
  }
}

</mosaic_0001>

<llo_original>
// kernel: tpu_custom_call.1
$region0: #{tpu_custom_call.1}
  #allocation0 [shape = 'u32[]', space=smem, size = 0x4, offset = 0x4, fixed_abs, tag = 'smem constant byte address 0x4 - core index']
  #allocation1 [shape = 'u32[144,128]{1,0:T(1,128)}', space=vmem, size = 0x12000, scoped, tag = 'internal scratch']
  #allocation2 [shape = 'f32[8,128]{1,0:T(8,128)}', space=vmem, size = 0x1000, scoped, tag = 'scratch operand']
  %s0 = inlined_call_operand.hbm [shape: f32[16,128], index: 0, kind: input, shape index: {}]
  %s1 = inlined_call_operand.hbm [shape: f32[256,128], index: 1, kind: input, shape index: {}]
  %s2 = inlined_call_operand.vmem [shape: f32[1,256], index: 2, kind: input, shape index: {}]
  %s3 = inlined_call_operand.hbm [shape: f32[256,128], index: 3, kind: input, shape index: {}]
  %s4 = inlined_call_operand.vmem [shape: f32[1,128], index: 4, kind: input, shape index: {}]
  %s5 = inlined_call_operand.hbm [shape: f32[16,128], index: 5, kind: output, shape index: {}]
  %s6 = sld [smem:[#allocation0]]
  $region73: #{tpu_custom_call.1} parent=0
    _
  %s8 = ssub.s32 1, %s6
  %s9 = scalar_select 0, %s8, %s6
  $region1: #{tpu_custom_call.1} parent=0
    #allocation3 [shape = 'u8[8192]{0}', space=vmem, size = 0x2000, scoped, tag = 'input window, operand 0']
    #allocation4 [shape = 's32[2]{0}', space=sflag, size = 0x8, scoped, tag = 'scoped memory for tpu_custom_call.1']
    #allocation5 [shape = 's32[2]{0}', space=sflag, size = 0x8, scoped, tag = 'scoped memory for tpu_custom_call.1']
    #allocation6 [shape = 'u8[131072]{0}', space=vmem, size = 0x20000, scoped, tag = 'input window, operand 1, single buffered']
    #allocation7 [shape = 's32[1]{0}', space=sflag, size = 0x4, scoped, tag = 'scoped memory for tpu_custom_call.1']
    #allocation8 [shape = 'u8[131072]{0}', space=vmem, size = 0x20000, scoped, tag = 'input window, operand 3, single buffered']
    #allocation9 [shape = 'u8[8192]{0}', space=vmem, size = 0x2000, scoped, tag = 'output window, operand 0']
    %10 = vsyncpa [#allocation4], 0
    %s11 = scalar_lea.sflag [#allocation4], 1
    %12 = vsyncpa %s11, 0
    %13 = vsyncpa [#allocation7], 0
    %14 = vsyncpa [#allocation5], 0
    %s15 = scalar_lea.sflag [#allocation5], 1
    %16 = vsyncpa %s15, 0
    loop: start=0, step=1, limit=4
    $region2: #{tpu_custom_call.1} parent=1 // loop_pre_header
      _
    $region3: #{tpu_custom_call.1} parent=1 // loop_header
      %s18 = sphi 0, %s22
      %p19 = scmp.ge.s32.totalorder %s18, 4
      %s25 = sphi 0, %s37
      %s26 = sphi 0, %s33
      %s27 = sphi 0, %s25
      %s28 = sphi 0, %s26
      %s29 = sphi 0, %s27
      %s30 = sphi 0, %s28
      %s40 = sphi 0, %s42
      %s43 = sphi 0, %s40
      %s44 = sphi 0, %s43
      %s60 = sphi 0, %s44
      %s66 = sphi 0, %s68
      %s69 = sphi 0, %s66
      %s70 = sphi 0, %s69
      %s86 = sphi 0, %s70
      %s92 = sphi 0, %s94
      %s95 = sphi 0, %s92
      %s96 = sphi 0, %s95
      %s112 = sphi 0, %s96
      %s118 = sphi 0, %s120
      %s121 = sphi 0, %s118
      %s122 = sphi 0, %s121
      %s138 = sphi 0, %s122
      %s142 = sphi 0, %s142
      %s144 = sphi 0, %s142
      %s145 = sphi 0, %s144
      %s159 = sphi 0, %s145
      %s165 = sphi 0, %s167
      %s168 = sphi 0, %s165
      %s169 = sphi 0, %s168
      %s185 = sphi 0, %s169
    $region4: #{tpu_custom_call.1} parent=1 // loop_header_branch
      %21 = sbr.rel (%p19) target = $region8
    $region5: #{tpu_custom_call.1} parent=1 // loop_body
      %s23 = ssub.s32 %s18, 1
      %s24 = ssub.s32 %s18, 2
      %s31 = sadd.s32 1, %s26
      %p32 = scmp.ge.s32.totalorder %s31, 1
      %s33 = scalar_select %p32, 0, %s31
      %s34 = sadd.s32 1, %s25
      %s35 = scalar_select %p32, %s34, %s25
      %p36 = scmp.ge.s32.totalorder %s35, 2
      %s37 = scalar_select %p36, 0, %s35
      %s38 = ssub.s32 %s25, %s37
      %p39 = scmp.eq.s32.totalorder %s38, 0
      %s41 = sadd.s32 %s40, 1
      %s42 = scalar_select %p39, %s40, %s41
      %p45 = pneg %p39
      %p46 = scmp.eq.s32.totalorder %s18, 1
      %p47 = por %p45, %p46
      %p48 = scmp.ne.s32.totalorder %s40, %s43
      %p49 = scmp.eq.s32.totalorder %s18, 0
      %p50 = por %p48, %p49
      %p51 = scmp.ne.s32.totalorder %s40, %s43
      %p52 = scmp.eq.s32.totalorder %s23, 1
      %p53 = por %p51, %p52
      %p54 = scmp.ne.s32.totalorder %s43, %s44
      %p55 = scmp.eq.s32.totalorder %s23, 0
      %p56 = por %p54, %p55
      %p57 = scmp.ne.s32.totalorder %s43, %s44
      %p58 = scmp.eq.s32.totalorder %s24, 1
      %p59 = por %p57, %p58
      %p61 = scmp.ne.s32.totalorder %s44, %s60
      %p62 = scmp.eq.s32.totalorder %s24, 0
      %p63 = por %p61, %p62
      %s64 = ssub.s32 %s26, %s33
      %p65 = scmp.eq.s32.totalorder %s64, 0
      %s67 = sadd.s32 %s66, 1
      %s68 = scalar_select %p65, %s66, %s67
      %p71 = pneg %p65
      %p72 = scmp.eq.s32.totalorder %s18, 1
      %p73 = por %p71, %p72
      %p74 = scmp.ne.s32.totalorder %s66, %s69
      %p75 = scmp.eq.s32.totalorder %s18, 0
      %p76 = por %p74, %p75
      %p77 = scmp.ne.s32.totalorder %s66, %s69
      %p78 = scmp.eq.s32.totalorder %s23, 1
      %p79 = por %p77, %p78
      %p80 = scmp.ne.s32.totalorder %s69, %s70
      %p81 = scmp.eq.s32.totalorder %s23, 0
      %p82 = por %p80, %p81
      %p83 = scmp.ne.s32.totalorder %s69, %s70
      %p84 = scmp.eq.s32.totalorder %s24, 1
      %p85 = por %p83, %p84
      %p87 = scmp.ne.s32.totalorder %s70, %s86
      %p88 = scmp.eq.s32.totalorder %s24, 0
      %p89 = por %p87, %p88
      %s90 = ssub.s32 %s26, %s33
      %p91 = scmp.eq.s32.totalorder %s90, 0
      %s93 = sadd.s32 %s92, 1
      %s94 = scalar_select %p91, %s92, %s93
      %p97 = pneg %p91
      %p98 = scmp.eq.s32.totalorder %s18, 1
      %p99 = por %p97, %p98
      %p100 = scmp.ne.s32.totalorder %s92, %s95
      %p101 = scmp.eq.s32.totalorder %s18, 0
      %p102 = por %p100, %p101
      %p103 = scmp.ne.s32.totalorder %s92, %s95
      %p104 = scmp.eq.s32.totalorder %s23, 1
      %p105 = por %p103, %p104
      %p106 = scmp.ne.s32.totalorder %s95, %s96
      %p107 = scmp.eq.s32.totalorder %s23, 0
      %p108 = por %p106, %p107
      %p109 = scmp.ne.s32.totalorder %s95, %s96
      %p110 = scmp.eq.s32.totalorder %s24, 1
      %p111 = por %p109, %p110
      %p113 = scmp.ne.s32.totalorder %s96, %s112
      %p114 = scmp.eq.s32.totalorder %s24, 0
      %p115 = por %p113, %p114
      %s116 = ssub.s32 %s26, %s33
      %p117 = scmp.eq.s32.totalorder %s116, 0
      %s119 = sadd.s32 %s118, 1
      %s120 = scalar_select %p117, %s118, %s119
      %p123 = pneg %p117
      %p124 = scmp.eq.s32.totalorder %s18, 1
      %p125 = por %p123, %p124
      %p126 = scmp.ne.s32.totalorder %s118, %s121
      %p127 = scmp.eq.s32.totalorder %s18, 0
      %p128 = por %p126, %p127
      %p129 = scmp.ne.s32.totalorder %s118, %s121
      %p130 = scmp.eq.s32.totalorder %s23, 1
      %p131 = por %p129, %p130
      %p132 = scmp.ne.s32.totalorder %s121, %s122
      %p133 = scmp.eq.s32.totalorder %s23, 0
      %p134 = por %p132, %p133
      %p135 = scmp.ne.s32.totalorder %s121, %s122
      %p136 = scmp.eq.s32.totalorder %s24, 1
      %p137 = por %p135, %p136
      %p139 = scmp.ne.s32.totalorder %s122, %s138
      %p140 = scmp.eq.s32.totalorder %s24, 0
      %p141 = por %p139, %p140
      %s143 = sadd.s32 %s142, 1
      %p146 = scmp.eq.s32.totalorder %s18, 1
      %p147 = scmp.ne.s32.totalorder %s142, %s144
      %p148 = scmp.eq.s32.totalorder %s18, 0
      %p149 = por %p147, %p148
      %p150 = scmp.ne.s32.totalorder %s142, %s144
      %p151 = scmp.eq.s32.totalorder %s23, 1
      %p152 = por %p150, %p151
      %p153 = scmp.ne.s32.totalorder %s144, %s145
      %p154 = scmp.eq.s32.totalorder %s23, 0
      %p155 = por %p153, %p154
      %p156 = scmp.ne.s32.totalorder %s144, %s145
      %p157 = scmp.eq.s32.totalorder %s24, 1
      %p158 = por %p156, %p157
      %p160 = scmp.ne.s32.totalorder %s145, %s159
      %p161 = scmp.eq.s32.totalorder %s24, 0
      %p162 = por %p160, %p161
      %s163 = ssub.s32 %s25, %s37
      %p164 = scmp.eq.s32.totalorder %s163, 0
      %s166 = sadd.s32 %s165, 1
      %s167 = scalar_select %p164, %s165, %s166
      %p170 = pneg %p164
      %p171 = scmp.eq.s32.totalorder %s18, 1
      %p172 = por %p170, %p171
      %p173 = scmp.ne.s32.totalorder %s165, %s168
      %p174 = scmp.eq.s32.totalorder %s18, 0
      %p175 = por %p173, %p174
      %p176 = scmp.ne.s32.totalorder %s165, %s168
      %p177 = scmp.eq.s32.totalorder %s23, 1
      %p178 = por %p176, %p177
      %p179 = scmp.ne.s32.totalorder %s168, %s169
      %p180 = scmp.eq.s32.totalorder %s23, 0
      %p181 = por %p179, %p180
      %p182 = scmp.ne.s32.totalorder %s168, %s169
      %p183 = scmp.eq.s32.totalorder %s24, 1
      %p184 = por %p182, %p183
      %p186 = scmp.ne.s32.totalorder %s169, %s185
      %p187 = scmp.eq.s32.totalorder %s24, 0
      %p188 = por %p186, %p187
      %p189 = scmp.le.s32.totalorder 1, %s18
      %p190 = scmp.lt.s32.totalorder %s18, 3
      %p191 = pnand %p189, %p190
      %p192 = pneg %p191
      // Predicated region
      $region9: #{tpu_custom_call.1} parent=5 // pred_check
        _
      $region10: #{tpu_custom_call.1} parent=5 // pred_check_branch
        %194 = sbr.rel (%p191) target = $region12
      $region11: #{tpu_custom_call.1} parent=5 // pred_region
        %s195 = ssub.s32 %s18, 1
        // Predicated region
        $region13: #{tpu_custom_call.1} parent=11 // pred_check
          %p196 = pneg %p82
        $region14: #{tpu_custom_call.1} parent=11 // pred_check_branch
          %198 = sbr.rel (%p196) target = $region16
        $region15: #{tpu_custom_call.1} parent=11 // pred_region
          %s199 = smul.u32 32, %s28
          %s201 = ssub.s32 4096, 4096
          %202 = vsyncadd [#allocation7], %s201
          %s203 = smul.addr %s199, 128
          %s204 = scalar_lea.hbm %s1, %s203
          %s205 = sshll.u32 [#allocation6], 4
          %s206 = int_to_ptr.vmem [resolvable:$true] %s205
          %211 = dma.hbm_to_vmem [thread:$0]  %s204, 4096, %s206, [#allocation7], 128, 128, 8
        $region16: #{tpu_custom_call.1} parent=11 // pred_fallthru
          _
        // Predicated region
        $region17: #{tpu_custom_call.1} parent=11 // pred_check
          %p212 = pneg %p108
        $region18: #{tpu_custom_call.1} parent=11 // pred_check_branch
          %214 = sbr.rel (%p212) target = $region20
        $region19: #{tpu_custom_call.1} parent=11 // pred_region
          %s215 = smul.u32 2, %s28
          %p216 = scmp.lt.s32.totalorder %s215, 1
          %s217 = scalar_select %p216, %s215, 1
          %s218 = scalar_lea.vmem %s2, %s217
          %s219 = smul.u32 2, %s28
        $region20: #{tpu_custom_call.1} parent=11 // pred_fallthru
          _
        // Predicated region
        $region21: #{tpu_custom_call.1} parent=11 // pred_check
          %p220 = pneg %p134
        $region22: #{tpu_custom_call.1} parent=11 // pred_check_branch
          %222 = sbr.rel (%p220) target = $region24
        $region23: #{tpu_custom_call.1} parent=11 // pred_region
          %s223 = smul.u32 32, %s28
          %s225 = ssub.s32 4096, 4096
          %226 = vsyncadd [#allocation7], %s225
          %s227 = smul.addr %s223, 128
          %s228 = scalar_lea.hbm %s3, %s227
          %s229 = sshll.u32 [#allocation8], 4
          %s230 = int_to_ptr.vmem [resolvable:$true] %s229
          %235 = dma.hbm_to_vmem [thread:$0]  %s228, 4096, %s230, [#allocation7], 128, 128, 8
        $region24: #{tpu_custom_call.1} parent=11 // pred_fallthru
          _
        // Predicated region
        $region25: #{tpu_custom_call.1} parent=11 // pred_check
          %p236 = pneg %p155
        $region26: #{tpu_custom_call.1} parent=11 // pred_check_branch
          %238 = sbr.rel (%p236) target = $region28
        $region27: #{tpu_custom_call.1} parent=11 // pred_region
          _
        $region28: #{tpu_custom_call.1} parent=11 // pred_fallthru
          _
      $region12: #{tpu_custom_call.1} parent=5 // pred_fallthru
        _
      %p239 = scmp.lt.s32.totalorder %s18, 2
      // Predicated region
      $region29: #{tpu_custom_call.1} parent=5 // pred_check
        %p240 = pneg %p239
      $region30: #{tpu_custom_call.1} parent=5 // pred_check_branch
        %242 = sbr.rel (%p240) target = $region32
      $region31: #{tpu_custom_call.1} parent=5 // pred_region
        // Predicated region
        $region33: #{tpu_custom_call.1} parent=31 // pred_check
          %p243 = pneg %p50
        $region34: #{tpu_custom_call.1} parent=31 // pred_check_branch
          %245 = sbr.rel (%p243) target = $region36
        $region35: #{tpu_custom_call.1} parent=31 // pred_region
          %s246 = sand.u32 %s40, 1
          %s247 = scalar_lea.sflag [#allocation4], %s246
          %s248 = sand.u32 %s40, 1
          %s249 = smul.addr %s248, 8
          %s250 = scalar_lea.vmem [#allocation3], %s249
          %s252 = ssub.s32 128, 128
          %253 = vsyncadd %s247, %s252
          %s254 = smul.addr %s25, 128
          %s255 = scalar_lea.hbm %s0, %s254
          %s257 = sshll.u32 %s250, 4
          %s258 = int_to_ptr.vmem [resolvable:$true] %s257
          %260 = dma.hbm_to_vmem [thread:$0]  %s255, 128, %s258, %s247
        $region36: #{tpu_custom_call.1} parent=31 // pred_fallthru
          _
      $region32: #{tpu_custom_call.1} parent=5 // pred_fallthru
        _
      %p261 = scmp.le.s32.totalorder 1, %s18
      %p262 = scmp.lt.s32.totalorder %s18, 3
      %p263 = pnand %p261, %p262
      %p264 = pneg %p263
      // Predicated region
      $region37: #{tpu_custom_call.1} parent=5 // pred_check
        _
      $region38: #{tpu_custom_call.1} parent=5 // pred_check_branch
        %266 = sbr.rel (%p263) target = $region40
      $region39: #{tpu_custom_call.1} parent=5 // pred_region
        %s267 = ssub.s32 %s18, 1
        %s268 = sand.u32 %s43, 1
        %s269 = scalar_lea.sflag [#allocation4], %s268
        %s270 = sand.u32 %s43, 1
        %s271 = smul.addr %s270, 8
        %s272 = scalar_lea.vmem [#allocation3], %s271
        // Predicated region
        $region41: #{tpu_custom_call.1} parent=39 // pred_check
          %p273 = pneg %p56
        $region42: #{tpu_custom_call.1} parent=39 // pred_check_branch
          %275 = sbr.rel (%p273) target = $region44
        $region43: #{tpu_custom_call.1} parent=39 // pred_region
          %276 = dma.done %s269, 128
        $region44: #{tpu_custom_call.1} parent=39 // pred_fallthru
          _
        // Predicated region
        $region45: #{tpu_custom_call.1} parent=39 // pred_check
          %p277 = pneg %p82
        $region46: #{tpu_custom_call.1} parent=39 // pred_check_branch
          %279 = sbr.rel (%p277) target = $region48
        $region47: #{tpu_custom_call.1} parent=39 // pred_region
          %280 = dma.done [#allocation7], 4096
        $region48: #{tpu_custom_call.1} parent=39 // pred_fallthru
          _
        // Predicated region
        $region49: #{tpu_custom_call.1} parent=39 // pred_check
          %p281 = pneg %p134
        $region50: #{tpu_custom_call.1} parent=39 // pred_check_branch
          %283 = sbr.rel (%p281) target = $region52
        $region51: #{tpu_custom_call.1} parent=39 // pred_region
          %284 = dma.done [#allocation7], 4096
        $region52: #{tpu_custom_call.1} parent=39 // pred_fallthru
          _
        %s285 = sand.u32 %s43, 1
        %s286 = scalar_lea.sflag [#allocation4], %s285
        %s287 = sand.u32 %s43, 1
        %s288 = smul.addr %s287, 8
        %s289 = scalar_lea.vmem [#allocation3], %s288
        %p290 = pneg %p56
        %p291 = pneg %p53
        %p292 = pneg %p82
        %p293 = pneg %p79
        %s294 = smul.u32 2, %s28
        %p295 = scmp.lt.s32.totalorder %s294, 1
        %s296 = scalar_select %p295, %s294, 1
        %s297 = scalar_lea.vmem %s2, %s296
        %p298 = pneg %p108
        %p299 = pneg %p105
        %p300 = pneg %p134
        %p301 = pneg %p131
        %p302 = pneg %p155
        %p303 = pneg %p152
        %p304 = pneg %p181
        %p305 = pneg %p178
        %s306 = sand.u32 %s168, 1
        %s307 = scalar_lea.sflag [#allocation5], %s306
        %s308 = sand.u32 %s168, 1
        %s309 = smul.addr %s308, 8
        %s310 = scalar_lea.vmem [#allocation9], %s309
        %s311 = smul.u32 32, %s28
        %s312 = smul.u32 2, %s28
        %p313 = scmp.lt.s32.totalorder %s312, 1
        %s314 = scalar_select %p313, %s312, 1
        %s315 = scalar_lea.vmem %s2, %s314
        %s316 = smul.u32 2, %s28
        %s317 = smul.u32 32, %s28
        %p318 = scmp.eq.s32.totalorder %s28, 0
        // Predicated region
        $region53: #{tpu_custom_call.1} parent=39 // pred_check
          %p319 = pneg %p318
        $region54: #{tpu_custom_call.1} parent=39 // pred_check_branch
          %321 = sbr.rel (%p319) target = $region56
        $region55: #{tpu_custom_call.1} parent=39 // pred_region
          %v322 = vld [vmem:[%s4] sm:$0x1]
          %v324 = vlaneseq
          %v325 = vshrl.u32 %v324, 7
          %v326 = vsub.s32 0, %v325
          %v327 = vrot.slane %v322, %v326
          %329 = vst [vmem:[#allocation2] sm:$0xff] %v327
        $region56: #{tpu_custom_call.1} parent=39 // pred_fallthru
          _
        %v330 = vld [vmem:[%s272] sm:$0xff]
        %v331 = vld [vmem:[#allocation6] sm:$0xff]
        %v332 = vld [vmem:[#allocation6 + $0x8] sm:$0xff]
        %v333 = vld [vmem:[#allocation6 + $0x10] sm:$0xff]
        %v334 = vld [vmem:[#allocation6 + $0x18] sm:$0xff]
        %v335 = vld [vmem:[#allocation6 + $0x20] sm:$0xff]
        %v336 = vld [vmem:[#allocation6 + $0x28] sm:$0xff]
        %v337 = vld [vmem:[#allocation6 + $0x30] sm:$0xff]
        %v338 = vld [vmem:[#allocation6 + $0x38] sm:$0xff]
        %v339 = vld [vmem:[#allocation6 + $0x40] sm:$0xff]
        %v340 = vld [vmem:[#allocation6 + $0x48] sm:$0xff]
        %v341 = vld [vmem:[#allocation6 + $0x50] sm:$0xff]
        %v342 = vld [vmem:[#allocation6 + $0x58] sm:$0xff]
        %v343 = vld [vmem:[#allocation6 + $0x60] sm:$0xff]
        %v344 = vld [vmem:[#allocation6 + $0x68] sm:$0xff]
        %v345 = vld [vmem:[#allocation6 + $0x70] sm:$0xff]
        %v346 = vld [vmem:[#allocation6 + $0x78] sm:$0xff]
        %v347 = vld [vmem:[#allocation6 + $0x80] sm:$0xff]
        %v348 = vld [vmem:[#allocation6 + $0x88] sm:$0xff]
        %v349 = vld [vmem:[#allocation6 + $0x90] sm:$0xff]
        %v350 = vld [vmem:[#allocation6 + $0x98] sm:$0xff]
        %v351 = vld [vmem:[#allocation6 + $0xa0] sm:$0xff]
        %v352 = vld [vmem:[#allocation6 + $0xa8] sm:$0xff]
        %v353 = vld [vmem:[#allocation6 + $0xb0] sm:$0xff]
        %v354 = vld [vmem:[#allocation6 + $0xb8] sm:$0xff]
        %v355 = vld [vmem:[#allocation6 + $0xc0] sm:$0xff]
        %v356 = vld [vmem:[#allocation6 + $0xc8] sm:$0xff]
        %v357 = vld [vmem:[#allocation6 + $0xd0] sm:$0xff]
        %v358 = vld [vmem:[#allocation6 + $0xd8] sm:$0xff]
        %v359 = vld [vmem:[#allocation6 + $0xe0] sm:$0xff]
        %v360 = vld [vmem:[#allocation6 + $0xe8] sm:$0xff]
        %v361 = vld [vmem:[#allocation6 + $0xf0] sm:$0xff]
        %v362 = vld [vmem:[#allocation6 + $0xf8] sm:$0xff]
        %v363 = vld [vmem:[%s315] sm:$0x3]
        %v365 = vlaneseq
        %v366 = vshrl.u32 %v365, 7
        %v367 = vsub.s32 0, %v366
        %v368 = vrot.slane %v363, %v367
        %v369 = vlaneseq
        %v370 = vshrl.u32 %v369, 7
        %v371 = vsub.s32 1, %v370
        %v372 = vrot.slane %v363, %v371
        %375 = vmatprep.subr.mxu0 0.0
        %376 = vmatpush1.xpose.msra.mxu0 %v346
        %377 = vmatprep.subr.mxu0 0.0
        %378 = vmatpush1.xpose.msra.mxu0 %v345
        %379 = vmatprep.subr.mxu0 0.0
        %380 = vmatpush1.xpose.msra.mxu0 %v344
        %381 = vmatprep.subr.mxu0 0.0
        %382 = vmatpush1.xpose.msra.mxu0 %v343
        %383 = vmatprep.subr.mxu0 0.0
        %384 = vmatpush1.xpose.msra.mxu0 %v342
        %385 = vmatprep.subr.mxu0 0.0
        %386 = vmatpush1.xpose.msra.mxu0 %v341
        %387 = vmatprep.subr.mxu0 0.0
        %388 = vmatpush1.xpose.msra.mxu0 %v340
        %389 = vmatprep.subr.mxu0 0.0
        %390 = vmatpush1.xpose.msra.mxu0 %v339
        %391 = vmatprep.subr.mxu0 0.0
        %392 = vmatpush1.xpose.msra.mxu0 %v338
        %393 = vmatprep.subr.mxu0 0.0
        %394 = vmatpush1.xpose.msra.mxu0 %v337
        %395 = vmatprep.subr.mxu0 0.0
        %396 = vmatpush1.xpose.msra.mxu0 %v336
        %397 = vmatprep.subr.mxu0 0.0
        %398 = vmatpush1.xpose.msra.mxu0 %v335
        %399 = vmatprep.subr.mxu0 0.0
        %400 = vmatpush1.xpose.msra.mxu0 %v334
        %401 = vmatprep.subr.mxu0 0.0
        %402 = vmatpush1.xpose.msra.mxu0 %v333
        %403 = vmatprep.subr.mxu0 0.0
        %404 = vmatpush1.xpose.msra.mxu0 %v332
        %405 = vmatprep.subr.mxu0 0.0
        %406 = vmatpush1.xpose.msra.mxu0 %v331
        %407 = vmatprep.subr.mxu0 0.0
        %408 = vmatpush2.xpose.msra.mxu0 %v362
        %409 = vmatprep.subr.mxu0 0.0
        %410 = vmatpush2.xpose.msra.mxu0 %v361
        %411 = vmatprep.subr.mxu0 0.0
        %412 = vmatpush2.xpose.msra.mxu0 %v360
        %413 = vmatprep.subr.mxu0 0.0
        %414 = vmatpush2.xpose.msra.mxu0 %v359
        %415 = vmatprep.subr.mxu0 0.0
        %416 = vmatpush2.xpose.msra.mxu0 %v358
        %417 = vmatprep.subr.mxu0 0.0
        %418 = vmatpush2.xpose.msra.mxu0 %v357
        %419 = vmatprep.subr.mxu0 0.0
        %420 = vmatpush2.xpose.msra.mxu0 %v356
        %421 = vmatprep.subr.mxu0 0.0
        %422 = vmatpush2.xpose.msra.mxu0 %v355
        %423 = vmatprep.subr.mxu0 0.0
        %424 = vmatpush2.xpose.msra.mxu0 %v354
        %425 = vmatprep.subr.mxu0 0.0
        %426 = vmatpush2.xpose.msra.mxu0 %v353
        %427 = vmatprep.subr.mxu0 0.0
        %428 = vmatpush2.xpose.msra.mxu0 %v352
        %429 = vmatprep.subr.mxu0 0.0
        %430 = vmatpush2.xpose.msra.mxu0 %v351
        %431 = vmatprep.subr.mxu0 0.0
        %432 = vmatpush2.xpose.msra.mxu0 %v350
        %433 = vmatprep.subr.mxu0 0.0
        %434 = vmatpush2.xpose.msra.mxu0 %v349
        %435 = vmatprep.subr.mxu0 0.0
        %436 = vmatpush2.xpose.msra.mxu0 %v348
        %437 = vmatprep.subr.mxu0 0.0
        %438 = vmatpush2.xpose.msra.mxu0 %v347
        %439 = vmatprep.mubr.f32.mxu0 0.0
        %440 = vmatmul.mubr.f32.gmra.mxu0 %v330
        %v441 = vpop.f32.mrf.mxu0
        %v442 = vadd.f32 %v368, %v441
        %v443 = vpop.f32.mrf.mxu0
        %v444 = vadd.f32 %v372, %v443
        %445 = vdwg.mxu0
        %v446 = vmul.f32 %v442, 0.5
        %v447 = vmul.f32 %v444, 0.5
        %v448 = vmul.f32 %v442, 0.70710677
        %v449 = vmul.f32 %v444, 0.70710677
        %v450 = verf.f32.pop %v448
        %v451 = verf.f32.pop %v449
        %v452 = vadd.f32 %v450, 1.0
        %v453 = vadd.f32 %v451, 1.0
        %v454 = vmul.f32 %v446, %v452
        %v455 = vmul.f32 %v447, %v453
        %v456 = vld [vmem:[#allocation2] sm:$0xff]
        %v457 = vld [vmem:[#allocation8] sm:$0xff]
        %v458 = vld [vmem:[#allocation8 + $0x8] sm:$0xff]
        %v459 = vld [vmem:[#allocation8 + $0x10] sm:$0xff]
        %v460 = vld [vmem:[#allocation8 + $0x18] sm:$0xff]
        %v461 = vld [vmem:[#allocation8 + $0x20] sm:$0xff]
        %v462 = vld [vmem:[#allocation8 + $0x28] sm:$0xff]
        %v463 = vld [vmem:[#allocation8 + $0x30] sm:$0xff]
        %v464 = vld [vmem:[#allocation8 + $0x38] sm:$0xff]
        %v465 = vld [vmem:[#allocation8 + $0x40] sm:$0xff]
        %v466 = vld [vmem:[#allocation8 + $0x48] sm:$0xff]
        %v467 = vld [vmem:[#allocation8 + $0x50] sm:$0xff]
        %v468 = vld [vmem:[#allocation8 + $0x58] sm:$0xff]
        %v469 = vld [vmem:[#allocation8 + $0x60] sm:$0xff]
        %v470 = vld [vmem:[#allocation8 + $0x68] sm:$0xff]
        %v471 = vld [vmem:[#allocation8 + $0x70] sm:$0xff]
        %v472 = vld [vmem:[#allocation8 + $0x78] sm:$0xff]
        %v473 = vld [vmem:[#allocation8 + $0x80] sm:$0xff]
        %v474 = vld [vmem:[#allocation8 + $0x88] sm:$0xff]
        %v475 = vld [vmem:[#allocation8 + $0x90] sm:$0xff]
        %v476 = vld [vmem:[#allocation8 + $0x98] sm:$0xff]
        %v477 = vld [vmem:[#allocation8 + $0xa0] sm:$0xff]
        %v478 = vld [vmem:[#allocation8 + $0xa8] sm:$0xff]
        %v479 = vld [vmem:[#allocation8 + $0xb0] sm:$0xff]
        %v480 = vld [vmem:[#allocation8 + $0xb8] sm:$0xff]
        %v481 = vld [vmem:[#allocation8 + $0xc0] sm:$0xff]
        %v482 = vld [vmem:[#allocation8 + $0xc8] sm:$0xff]
        %v483 = vld [vmem:[#allocation8 + $0xd0] sm:$0xff]
        %v484 = vld [vmem:[#allocation8 + $0xd8] sm:$0xff]
        %v485 = vld [vmem:[#allocation8 + $0xe0] sm:$0xff]
        %v486 = vld [vmem:[#allocation8 + $0xe8] sm:$0xff]
        %v487 = vld [vmem:[#allocation8 + $0xf0] sm:$0xff]
        %v488 = vld [vmem:[#allocation8 + $0xf8] sm:$0xff]
        %489 = vmatprep.subr.mxu0 0.0
        %490 = vmatpush1.msra.mxu0 %v472
        %491 = vmatprep.subr.mxu0 0.0
        %492 = vmatpush1.msra.mxu0 %v471
        %493 = vmatprep.subr.mxu0 0.0
        %494 = vmatpush1.msra.mxu0 %v470
        %495 = vmatprep.subr.mxu0 0.0
        %496 = vmatpush1.msra.mxu0 %v469
        %497 = vmatprep.subr.mxu0 0.0
        %498 = vmatpush1.msra.mxu0 %v468
        %499 = vmatprep.subr.mxu0 0.0
        %500 = vmatpush1.msra.mxu0 %v467
        %501 = vmatprep.subr.mxu0 0.0
        %502 = vmatpush1.msra.mxu0 %v466
        %503 = vmatprep.subr.mxu0 0.0
        %504 = vmatpush1.msra.mxu0 %v465
        %505 = vmatprep.subr.mxu0 0.0
        %506 = vmatpush1.msra.mxu0 %v464
        %507 = vmatprep.subr.mxu0 0.0
        %508 = vmatpush1.msra.mxu0 %v463
        %509 = vmatprep.subr.mxu0 0.0
        %510 = vmatpush1.msra.mxu0 %v462
        %511 = vmatprep.subr.mxu0 0.0
        %512 = vmatpush1.msra.mxu0 %v461
        %513 = vmatprep.subr.mxu0 0.0
        %514 = vmatpush1.msra.mxu0 %v460
        %515 = vmatprep.subr.mxu0 0.0
        %516 = vmatpush1.msra.mxu0 %v459
        %517 = vmatprep.subr.mxu0 0.0
        %518 = vmatpush1.msra.mxu0 %v458
        %519 = vmatprep.subr.mxu0 0.0
        %520 = vmatpush1.msra.mxu0 %v457
        %521 = vmatprep.subr.mxu0 0.0
        %522 = vmatpush2.msra.mxu0 %v488
        %523 = vmatprep.subr.mxu0 0.0
        %524 = vmatpush2.msra.mxu0 %v487
        %525 = vmatprep.subr.mxu0 0.0
        %526 = vmatpush2.msra.mxu0 %v486
        %527 = vmatprep.subr.mxu0 0.0
        %528 = vmatpush2.msra.mxu0 %v485
        %529 = vmatprep.subr.mxu0 0.0
        %530 = vmatpush2.msra.mxu0 %v484
        %531 = vmatprep.subr.mxu0 0.0
        %532 = vmatpush2.msra.mxu0 %v483
        %533 = vmatprep.subr.mxu0 0.0
        %534 = vmatpush2.msra.mxu0 %v482
        %535 = vmatprep.subr.mxu0 0.0
        %536 = vmatpush2.msra.mxu0 %v481
        %537 = vmatprep.subr.mxu0 0.0
        %538 = vmatpush2.msra.mxu0 %v480
        %539 = vmatprep.subr.mxu0 0.0
        %540 = vmatpush2.msra.mxu0 %v479
        %541 = vmatprep.subr.mxu0 0.0
        %542 = vmatpush2.msra.mxu0 %v478
        %543 = vmatprep.subr.mxu0 0.0
        %544 = vmatpush2.msra.mxu0 %v477
        %545 = vmatprep.subr.mxu0 0.0
        %546 = vmatpush2.msra.mxu0 %v476
        %547 = vmatprep.subr.mxu0 0.0
        %548 = vmatpush2.msra.mxu0 %v475
        %549 = vmatprep.subr.mxu0 0.0
        %550 = vmatpush2.msra.mxu0 %v474
        %551 = vmatprep.subr.mxu0 0.0
        %552 = vmatpush2.msra.mxu0 %v473
        %553 = vmatprep.mubr.f32.mxu0 %v455
        %554 = vmatmul.mubr.f32.gmra.mxu0 %v454
        %v555 = vpop.f32.mrf.mxu0
        %v556 = vadd.f32 0.0, %v555
        %v557 = vpop.f32.mrf.mxu0
        %558 = vdwg.mxu0
        %v559 = vadd.f32 %v456, %v556
        %560 = vst [vmem:[#allocation2] sm:$0xff] %v559
        // Predicated region
        $region57: #{tpu_custom_call.1} parent=39 // pred_check
          %p561 = pneg %p318
        $region58: #{tpu_custom_call.1} parent=39 // pred_check_branch
          %563 = sbr.rel (%p561) target = $region60
        $region59: #{tpu_custom_call.1} parent=39 // pred_region
          %v564 = vld [vmem:[#allocation2] sm:$0xff]
          %565 = vst [vmem:[%s310] sm:$0xff] %v564
        $region60: #{tpu_custom_call.1} parent=39 // pred_fallthru
          _
        %s566 = sand.u32 %s168, 1
        %s567 = scalar_lea.sflag [#allocation5], %s566
        %s568 = sand.u32 %s168, 1
        %s569 = smul.addr %s568, 8
        %s570 = scalar_lea.vmem [#allocation9], %s569
        // Predicated region
        $region61: #{tpu_custom_call.1} parent=39 // pred_check
          %p571 = pneg %p178
        $region62: #{tpu_custom_call.1} parent=39 // pred_check_branch
          %573 = sbr.rel (%p571) target = $region64
        $region63: #{tpu_custom_call.1} parent=39 // pred_region
          %s575 = ssub.s32 128, 128
          %576 = vsyncadd %s567, %s575
          %s577 = smul.addr %s27, 128
          %s578 = scalar_lea.hbm %s5, %s577
          %s580 = sshll.u32 %s570, 4
          %s581 = int_to_ptr.vmem [resolvable:$true] %s580
          %583 = dma.vmem_to_hbm [thread:$0]  %s581, 128, %s578, %s567
        $region64: #{tpu_custom_call.1} parent=39 // pred_fallthru
          _
      $region40: #{tpu_custom_call.1} parent=5 // pred_fallthru
        _
      %p584 = scmp.le.s32.totalorder 2, %s18
      // Predicated region
      $region65: #{tpu_custom_call.1} parent=5 // pred_check
        %p585 = pneg %p584
      $region66: #{tpu_custom_call.1} parent=5 // pred_check_branch
        %587 = sbr.rel (%p585) target = $region68
      $region67: #{tpu_custom_call.1} parent=5 // pred_region
        %s588 = ssub.s32 %s18, 2
        // Predicated region
        $region69: #{tpu_custom_call.1} parent=67 // pred_check
          %p589 = pneg %p184
        $region70: #{tpu_custom_call.1} parent=67 // pred_check_branch
          %591 = sbr.rel (%p589) target = $region72
        $region71: #{tpu_custom_call.1} parent=67 // pred_region
          %s592 = sand.u32 %s169, 1
          %s593 = scalar_lea.sflag [#allocation5], %s592
          %s594 = sand.u32 %s169, 1
          %s595 = smul.addr %s594, 8
          %s596 = scalar_lea.vmem [#allocation9], %s595
          %597 = dma.done %s593, 128
        $region72: #{tpu_custom_call.1} parent=67 // pred_fallthru
          _
      $region68: #{tpu_custom_call.1} parent=5 // pred_fallthru
        _
    $region6: #{tpu_custom_call.1} parent=1 // loop_footer
      %s22 = sadd.s32 1, %s18
    $region7: #{tpu_custom_call.1} parent=1 // loop_footer_branch
      %17 = sbr.rel target = $region3
    $region8: #{tpu_custom_call.1} parent=1 // loop_exit
      _
    %598 = vsyncpa [#allocation4], 1
    %s599 = scalar_lea.sflag [#allocation4], 1
    %600 = vsyncpa %s599, 1
    %601 = vsyncpa [#allocation7], 1
    %602 = vsyncpa [#allocation5], 1
    %s603 = scalar_lea.sflag [#allocation5], 1
    %604 = vsyncpa %s603, 1

</llo_original>
